<compile_context>
chip_gen: v7x
topology: tpu7x:2x2x1
jax: 0.10.0
libtpu: 0.0.40
codegen_flags: <defaults>
</compile_context>

<pallas_src>
import jax
import jax.numpy as jnp
from jax.experimental import pallas as pl
from jax.experimental.pallas import tpu as pltpu


def encoder_head_kernel(flat_ref, w_ref, b_ref, hid_ref):
    # flat_ref: (tb, HW, C)  lane-dense in C        (one batch tile)
    # w_ref:    (C, hidden)  resident (constant index_map -> single fetch)
    # b_ref:    (1, hidden)  resident
    # hid_ref:  (tb, 1, hidden) f32 output block
    x = flat_ref[...]                                   # (tb, HW, C)
    inv_hw = 1.0 / x.shape[1]

    # AdaptiveAvgPool2d((1, 1)) == mean over H*W: sum over the sublane axis
    # (f32 accumulation) then one scalar scale -- no per-tile mean.
    pooled = jnp.sum(x, axis=1, dtype=jnp.float32) * inv_hw          # (tb, C) f32

    # init_hidden = pooled @ W.T + b  (w_ref already holds W.T = (C, hidden)).
    hid = jnp.dot(pooled, w_ref[...], preferred_element_type=jnp.float32)
    hid = hid + b_ref[...]                                           # (tb, hidden)
    hid_ref[...] = hid.astype(hid_ref.dtype)[:, None, :]             # (tb, 1, hidden)


def _pick_tb(B, HW, C, itemsize, vmem_budget=16 << 20):
    """Largest divisor of B that (a) leaves >= 2 batch grid steps when B >= 2
    (so v7x megacore can shard the 'parallel' axis) and (b) keeps the
    double-buffered input block within the VMEM budget."""
    cap = min(8, max(1, B // 2)) if B >= 2 else 1
    for tb in range(cap, 0, -1):
        if B % tb == 0 and 2 * tb * HW * C * itemsize <= vmem_budget:
            return tb
    return 1


def encoder_cnn_head(feats, w_t, bias, *, tb=None):
    """feats: (B, C, H, W) NCHW backbone output; w_t: (C, hidden) = Linear.weight.T;
    bias: (hidden,). Returns (flat (B, H*W, C), init_hidden (B, hidden))."""
    B, C, H, W = feats.shape
    HW = H * W
    hidden = w_t.shape[1]

    # flat = feats.view(B, C, H*W).permute(0, 2, 1): one XLA relayout in the
    # wrapper. This keeps the transpose off the kernel's XLU path and hands the
    # kernel a lane-dense (HW, C) view, so the pool is a cheap sublane reduce.
    flat = jnp.transpose(feats.reshape(B, C, HW), (0, 2, 1))          # (B, HW, C)

    itemsize = jnp.dtype(feats.dtype).itemsize
    w_itemsize = jnp.dtype(w_t.dtype).itemsize
    if tb is None:
        tb = _pick_tb(B, HW, C, itemsize)
    assert B % tb == 0

    bias2 = bias.reshape(1, hidden)

    cost = pl.CostEstimate(
        flops=B * C * HW + 2 * B * C * hidden,
        transcendentals=0,
        bytes_accessed=(B * HW * C * itemsize       # read flat
                        + C * hidden * w_itemsize   # weights (fetched once)
                        + hidden * 4                # bias
                        + B * hidden * 4),          # init_hidden out
    )

    # VMEM: double-buffered flat block + resident weight/bias + output block.
    vmem_needed = (2 * tb * HW * C * itemsize
                   + 2 * C * hidden * w_itemsize
                   + 2 * hidden * 4
                   + 2 * tb * hidden * 4)
    vmem_limit = min(48 << 20, max(int(vmem_needed * 1.5) + (1 << 20), 32 << 20))

    hid3 = pl.pallas_call(
        encoder_head_kernel,
        out_shape=jax.ShapeDtypeStruct((B, 1, hidden), jnp.float32),
        grid_spec=pltpu.PrefetchScalarGridSpec(
            num_scalar_prefetch=0,
            grid=(B // tb,),                                   # batch axis only
            in_specs=[
                pl.BlockSpec((tb, HW, C), lambda b: (b, 0, 0)),
                pl.BlockSpec((C, hidden), lambda b: (0, 0)),   # resident weight
                pl.BlockSpec((1, hidden), lambda b: (0, 0)),   # resident bias
            ],
            out_specs=pl.BlockSpec((tb, 1, hidden), lambda b: (b, 0, 0)),
        ),
        compiler_params=pltpu.CompilerParams(
            dimension_semantics=("parallel",),
            vmem_limit_bytes=vmem_limit),
        cost_estimate=cost,
    )(flat, w_t, bias2)

    return flat, hid3.reshape(B, hidden)


if __name__ == "__main__":
    # Shapes consistent with the module: ResNet50[:-3] emits 1024 channels;
    # use a tiny 4x4 spatial map and hidden_size=32.
    B, C, H, W = 2, 1024, 4, 4
    hidden_size = 32

    key = jax.random.PRNGKey(0)
    k_feats, k_w, k_b = jax.random.split(key, 3)

    # Synthetic backbone output features (stand-in for resnet50[:-3](images)).
    feats = jax.random.normal(k_feats, (B, C, H, W), dtype=jnp.float32)

    # Deterministic nn.Linear(1024, hidden_size) init (uniform +-1/sqrt(fan_in)).
    bound = 1.0 / jnp.sqrt(jnp.float32(C))
    w = jax.random.uniform(k_w, (hidden_size, C), jnp.float32, -bound, bound)
    b = jax.random.uniform(k_b, (hidden_size,), jnp.float32, -bound, bound)

    flat, init_hidden = jax.jit(encoder_cnn_head)(feats, w.T, b)
    jax.block_until_ready((flat, init_hidden))

    # Pure-JAX reference of the torch forward body.
    flat_ref = jnp.transpose(feats.reshape(B, C, H * W), (0, 2, 1))
    pooled_ref = jnp.mean(feats, axis=(2, 3))
    hid_ref = pooled_ref @ w.T + b

    assert flat.shape == (B, H * W, C)
    assert init_hidden.shape == (B, hidden_size)
    assert jnp.allclose(flat, flat_ref, atol=1e-5, rtol=1e-5)
    assert jnp.allclose(init_hidden, hid_ref, atol=1e-4, rtol=1e-4)

    print("KERNEL_OK")
</pallas_src>

<mosaic_0001>
module attributes {stable_mosaic.version = 11 : i64} {
  func.func @encoder_head_kernel(%arg0: i32, %arg1: memref<1x16x1024xf32, #tpu.memory_space<vmem>>, %arg2: memref<1024x32xf32, #tpu.memory_space<vmem>>, %arg3: memref<1x32xf32, #tpu.memory_space<vmem>>, %arg4: memref<1x1x32xf32, #tpu.memory_space<vmem>>) attributes {dimension_semantics = [#tpu.dimension_semantics<parallel>], iteration_bounds = array<i64: 2>, scalar_prefetch = 0 : i64, scratch_operands = 0 : i64, tpu.core_type = #tpu.core_type<tc>, window_params = [{transform_indices = @transform_0, window_bounds = array<i64: 1, 16, 1024>}, {pipeline_mode = #tpu.pipeline_mode<synchronous>, transform_indices = @transform_1, window_bounds = array<i64: 1024, 32>}, {pipeline_mode = #tpu.pipeline_mode<synchronous>, transform_indices = @transform_2, window_bounds = array<i64: 1, 32>}, {transform_indices = @transform_3, window_bounds = array<i64: 1, 1, 32>}]} {
    %c0 = arith.constant 0 : index
    %c0_0 = arith.constant 0 : index
    %c0_1 = arith.constant 0 : index
    %0 = vector.load %arg1[%c0, %c0_0, %c0_1] : memref<1x16x1024xf32, #tpu.memory_space<vmem>>, vector<1x16x1024xf32>
    %cst = arith.constant dense<0.000000e+00> : vector<1x1024xf32>
    %1 = vector.multi_reduction <add>, %0, %cst [1] : vector<1x16x1024xf32> to vector<1x1024xf32>
    %cst_2 = arith.constant 6.250000e-02 : f32
    %2 = vector.broadcast %cst_2 : f32 to vector<1x1024xf32>
    %3 = arith.mulf %1, %2 : vector<1x1024xf32>
    %c0_3 = arith.constant 0 : index
    %c0_4 = arith.constant 0 : index
    %4 = vector.load %arg2[%c0_3, %c0_4] : memref<1024x32xf32, #tpu.memory_space<vmem>>, vector<1024x32xf32>
    %cst_5 = arith.constant dense<0.000000e+00> : vector<1x32xf32>
    %5 = tpu.matmul %3, %4, %cst_5 {dimension_numbers = #tpu.dot_dimension_numbers<[1], [0], [0], [1], [0, 0, 1, 1], [], []>} : vector<1x1024xf32>, vector<1024x32xf32>, vector<1x32xf32> -> vector<1x32xf32>
    %c0_6 = arith.constant 0 : index
    %c0_7 = arith.constant 0 : index
    %6 = vector.load %arg3[%c0_6, %c0_7] : memref<1x32xf32, #tpu.memory_space<vmem>>, vector<1x32xf32>
    %7 = arith.addf %5, %6 : vector<1x32xf32>
    %8 = vector.shape_cast %7 : vector<1x32xf32> to vector<1x1x32xf32>
    %c0_8 = arith.constant 0 : index
    %c0_9 = arith.constant 0 : index
    %c0_10 = arith.constant 0 : index
    %9 = vector.load %arg4[%c0_8, %c0_9, %c0_10] : memref<1x1x32xf32, #tpu.memory_space<vmem>>, vector<1x1x32xf32>
    tpu.vector_store %arg4[%c0_8, %c0_9, %c0_10], %8 {strides = array<i32>} : memref<1x1x32xf32, #tpu.memory_space<vmem>>, vector<1x1x32xf32>,
    return
  }
  func.func @transform_0(%arg0: i32) -> (i32, i32, i32) {
    %c0_i32 = arith.constant 0 : i32
    %c0_i32_0 = arith.constant 0 : i32
    %c0_i32_1 = arith.constant 0 : i32
    return %arg0, %c0_i32, %c0_i32_0 : i32, i32, i32
  }
  func.func @transform_1(%arg0: i32) -> (i32, i32) {
    %c0_i32 = arith.constant 0 : i32
    %c0_i32_0 = arith.constant 0 : i32
    %c0_i32_1 = arith.constant 0 : i32
    return %c0_i32, %c0_i32_0 : i32, i32
  }
  func.func @transform_2(%arg0: i32) -> (i32, i32) {
    %c0_i32 = arith.constant 0 : i32
    %c0_i32_0 = arith.constant 0 : i32
    %c0_i32_1 = arith.constant 0 : i32
    return %c0_i32, %c0_i32_0 : i32, i32
  }
  func.func @transform_3(%arg0: i32) -> (i32, i32, i32) {
    %c0_i32 = arith.constant 0 : i32
    %c0_i32_0 = arith.constant 0 : i32
    %c0_i32_1 = arith.constant 0 : i32
    return %arg0, %c0_i32, %c0_i32_0 : i32, i32, i32
  }
}

</mosaic_0001>

<llo_original>
// kernel: encoder_cnn_head.1
$region0: #{encoder_cnn_head.1}
  #allocation0 [shape = 'u32[]', space=smem, size = 0x4, offset = 0x4, fixed_abs, tag = 'smem constant byte address 0x4 - core index']
  #allocation1 [shape = 'u32[144,128]{1,0:T(1,128)}', space=vmem, size = 0x12000, scoped, tag = 'internal scratch']
  %s0 = inlined_call_operand.vmem [shape: f32[2,16,1024], index: 0, kind: input, shape index: {}]
  %s1 = inlined_call_operand.vmem [shape: f32[1024,32], index: 1, kind: input, shape index: {}]
  %s2 = inlined_call_operand.vmem [shape: f32[1,32], index: 2, kind: input, shape index: {}]
  %s3 = inlined_call_operand.hbm [shape: f32[2,1,32], index: 3, kind: output, shape index: {}]
  %s4 = sld [smem:[#allocation0]]
  $region45: #{encoder_cnn_head.1} parent=0
    _
  %s6 = ssub.s32 1, %s4
  %s7 = scalar_select 0, %s6, %s4
  $region1: #{encoder_cnn_head.1} parent=0
    #allocation2 [shape = 'u8[1024]{0}', space=vmem, size = 0x400, scoped, tag = 'output window, operand 0']
    #allocation3 [shape = 's32[2]{0}', space=sflag, size = 0x8, scoped, tag = 'scoped memory for encoder_cnn_head.1']
    %8 = vsyncpa [#allocation3], 0
    %s9 = scalar_lea.sflag [#allocation3], 1
    %10 = vsyncpa %s9, 0
    loop: start=0, step=1, limit=4
    $region2: #{encoder_cnn_head.1} parent=1 // loop_pre_header
      _
    $region3: #{encoder_cnn_head.1} parent=1 // loop_header
      %s12 = sphi 0, %s16
      %p13 = scmp.ge.s32.totalorder %s12, 4
      %s22 = sphi 0, %s24
      %s25 = sphi 0, %s22
      %s26 = sphi 0, %s25
      %s42 = sphi 0, %s26
      %s46 = sphi 0, %s46
      %s48 = sphi 0, %s46
      %s49 = sphi 0, %s48
      %s63 = sphi 0, %s49
      %s67 = sphi 0, %s67
      %s69 = sphi 0, %s67
      %s70 = sphi 0, %s69
      %s84 = sphi 0, %s70
      %s90 = sphi 0, %s92
      %s93 = sphi 0, %s90
      %s94 = sphi 0, %s93
      %s110 = sphi 0, %s94
    $region4: #{encoder_cnn_head.1} parent=1 // loop_header_branch
      %15 = sbr.rel (%p13) target = $region8
    $region5: #{encoder_cnn_head.1} parent=1 // loop_body
      %s17 = ssub.s32 %s12, 1
      %s18 = ssub.s32 %s12, 2
      %s19 = sadd.s32 %s12, 1
      %s20 = ssub.s32 %s12, %s19
      %p21 = scmp.eq.s32.totalorder %s20, 0
      %s23 = sadd.s32 %s22, 1
      %s24 = scalar_select %p21, %s22, %s23
      %p27 = pneg %p21
      %p28 = scmp.eq.s32.totalorder %s12, 1
      %p29 = por %p27, %p28
      %p30 = scmp.ne.s32.totalorder %s22, %s25
      %p31 = scmp.eq.s32.totalorder %s12, 0
      %p32 = por %p30, %p31
      %p33 = scmp.ne.s32.totalorder %s22, %s25
      %p34 = scmp.eq.s32.totalorder %s17, 1
      %p35 = por %p33, %p34
      %p36 = scmp.ne.s32.totalorder %s25, %s26
      %p37 = scmp.eq.s32.totalorder %s17, 0
      %p38 = por %p36, %p37
      %p39 = scmp.ne.s32.totalorder %s25, %s26
      %p40 = scmp.eq.s32.totalorder %s18, 1
      %p41 = por %p39, %p40
      %p43 = scmp.ne.s32.totalorder %s26, %s42
      %p44 = scmp.eq.s32.totalorder %s18, 0
      %p45 = por %p43, %p44
      %s47 = sadd.s32 %s46, 1
      %p50 = scmp.eq.s32.totalorder %s12, 1
      %p51 = scmp.ne.s32.totalorder %s46, %s48
      %p52 = scmp.eq.s32.totalorder %s12, 0
      %p53 = por %p51, %p52
      %p54 = scmp.ne.s32.totalorder %s46, %s48
      %p55 = scmp.eq.s32.totalorder %s17, 1
      %p56 = por %p54, %p55
      %p57 = scmp.ne.s32.totalorder %s48, %s49
      %p58 = scmp.eq.s32.totalorder %s17, 0
      %p59 = por %p57, %p58
      %p60 = scmp.ne.s32.totalorder %s48, %s49
      %p61 = scmp.eq.s32.totalorder %s18, 1
      %p62 = por %p60, %p61
      %p64 = scmp.ne.s32.totalorder %s49, %s63
      %p65 = scmp.eq.s32.totalorder %s18, 0
      %p66 = por %p64, %p65
      %s68 = sadd.s32 %s67, 1
      %p71 = scmp.eq.s32.totalorder %s12, 1
      %p72 = scmp.ne.s32.totalorder %s67, %s69
      %p73 = scmp.eq.s32.totalorder %s12, 0
      %p74 = por %p72, %p73
      %p75 = scmp.ne.s32.totalorder %s67, %s69
      %p76 = scmp.eq.s32.totalorder %s17, 1
      %p77 = por %p75, %p76
      %p78 = scmp.ne.s32.totalorder %s69, %s70
      %p79 = scmp.eq.s32.totalorder %s17, 0
      %p80 = por %p78, %p79
      %p81 = scmp.ne.s32.totalorder %s69, %s70
      %p82 = scmp.eq.s32.totalorder %s18, 1
      %p83 = por %p81, %p82
      %p85 = scmp.ne.s32.totalorder %s70, %s84
      %p86 = scmp.eq.s32.totalorder %s18, 0
      %p87 = por %p85, %p86
      %s88 = ssub.s32 %s12, %s19
      %p89 = scmp.eq.s32.totalorder %s88, 0
      %s91 = sadd.s32 %s90, 1
      %s92 = scalar_select %p89, %s90, %s91
      %p95 = pneg %p89
      %p96 = scmp.eq.s32.totalorder %s12, 1
      %p97 = por %p95, %p96
      %p98 = scmp.ne.s32.totalorder %s90, %s93
      %p99 = scmp.eq.s32.totalorder %s12, 0
      %p100 = por %p98, %p99
      %p101 = scmp.ne.s32.totalorder %s90, %s93
      %p102 = scmp.eq.s32.totalorder %s17, 1
      %p103 = por %p101, %p102
      %p104 = scmp.ne.s32.totalorder %s93, %s94
      %p105 = scmp.eq.s32.totalorder %s17, 0
      %p106 = por %p104, %p105
      %p107 = scmp.ne.s32.totalorder %s93, %s94
      %p108 = scmp.eq.s32.totalorder %s18, 1
      %p109 = por %p107, %p108
      %p111 = scmp.ne.s32.totalorder %s94, %s110
      %p112 = scmp.eq.s32.totalorder %s18, 0
      %p113 = por %p111, %p112
      %p114 = scmp.le.s32.totalorder 1, %s12
      %p115 = scmp.lt.s32.totalorder %s12, 3
      %p116 = pnand %p114, %p115
      %p117 = pneg %p116
      // Predicated region
      $region9: #{encoder_cnn_head.1} parent=5 // pred_check
        _
      $region10: #{encoder_cnn_head.1} parent=5 // pred_check_branch
        %119 = sbr.rel (%p116) target = $region12
      $region11: #{encoder_cnn_head.1} parent=5 // pred_region
        %s120 = ssub.s32 %s12, 1
        // Predicated region
        $region13: #{encoder_cnn_head.1} parent=11 // pred_check
          %p121 = pneg %p59
        $region14: #{encoder_cnn_head.1} parent=11 // pred_check_branch
          %123 = sbr.rel (%p121) target = $region16
        $region15: #{encoder_cnn_head.1} parent=11 // pred_region
          _
        $region16: #{encoder_cnn_head.1} parent=11 // pred_fallthru
          _
        // Predicated region
        $region17: #{encoder_cnn_head.1} parent=11 // pred_check
          %p124 = pneg %p80
        $region18: #{encoder_cnn_head.1} parent=11 // pred_check_branch
          %126 = sbr.rel (%p124) target = $region20
        $region19: #{encoder_cnn_head.1} parent=11 // pred_region
          _
        $region20: #{encoder_cnn_head.1} parent=11 // pred_fallthru
          _
      $region12: #{encoder_cnn_head.1} parent=5 // pred_fallthru
        _
      %p127 = scmp.lt.s32.totalorder %s12, 2
      // Predicated region
      $region21: #{encoder_cnn_head.1} parent=5 // pred_check
        %p128 = pneg %p127
      $region22: #{encoder_cnn_head.1} parent=5 // pred_check_branch
        %130 = sbr.rel (%p128) target = $region24
      $region23: #{encoder_cnn_head.1} parent=5 // pred_region
        // Predicated region
        $region25: #{encoder_cnn_head.1} parent=23 // pred_check
          %p131 = pneg %p32
        $region26: #{encoder_cnn_head.1} parent=23 // pred_check_branch
          %133 = sbr.rel (%p131) target = $region28
        $region27: #{encoder_cnn_head.1} parent=23 // pred_region
          %p134 = scmp.lt.s32.totalorder %s12, 1
          %s135 = scalar_select %p134, %s12, 1
          %s136 = smul.addr %s135, 16
          %s137 = smul.addr %s136, 8
          %s138 = scalar_lea.vmem %s0, %s137
        $region28: #{encoder_cnn_head.1} parent=23 // pred_fallthru
          _
      $region24: #{encoder_cnn_head.1} parent=5 // pred_fallthru
        _
      %p139 = scmp.le.s32.totalorder 1, %s12
      %p140 = scmp.lt.s32.totalorder %s12, 3
      %p141 = pnand %p139, %p140
      %p142 = pneg %p141
      // Predicated region
      $region29: #{encoder_cnn_head.1} parent=5 // pred_check
        _
      $region30: #{encoder_cnn_head.1} parent=5 // pred_check_branch
        %144 = sbr.rel (%p141) target = $region32
      $region31: #{encoder_cnn_head.1} parent=5 // pred_region
        %s145 = ssub.s32 %s12, 1
        %p146 = scmp.lt.s32.totalorder %s17, 1
        %s147 = scalar_select %p146, %s17, 1
        %s148 = smul.addr %s147, 16
        %s149 = smul.addr %s148, 8
        %s150 = scalar_lea.vmem %s0, %s149
        %p151 = pneg %p38
        %p152 = pneg %p35
        %p153 = pneg %p59
        %p154 = pneg %p56
        %p155 = pneg %p80
        %p156 = pneg %p77
        %p157 = pneg %p106
        %p158 = pneg %p103
        %s159 = sand.u32 %s93, 1
        %s160 = scalar_lea.sflag [#allocation3], %s159
        %s161 = sand.u32 %s93, 1
        %s162 = scalar_lea.vmem [#allocation2], %s161
        %p163 = scmp.lt.s32.totalorder %s17, 1
        %s164 = scalar_select %p163, %s17, 1
        %s165 = smul.addr %s164, 16
        %s166 = smul.addr %s165, 8
        %s167 = scalar_lea.vmem %s0, %s166
        %v168 = vld [vmem:[%s167] sm:$0xff]
        %v169 = vld [vmem:[%s167 + $0x8] sm:$0xff]
        %v170 = vld [vmem:[%s167 + $0x10] sm:$0xff]
        %v171 = vld [vmem:[%s167 + $0x18] sm:$0xff]
        %v172 = vld [vmem:[%s167 + $0x20] sm:$0xff]
        %v173 = vld [vmem:[%s167 + $0x28] sm:$0xff]
        %v174 = vld [vmem:[%s167 + $0x30] sm:$0xff]
        %v175 = vld [vmem:[%s167 + $0x38] sm:$0xff]
        %v176 = vld [vmem:[%s167 + $0x40] sm:$0xff]
        %v177 = vld [vmem:[%s167 + $0x48] sm:$0xff]
        %v178 = vld [vmem:[%s167 + $0x50] sm:$0xff]
        %v179 = vld [vmem:[%s167 + $0x58] sm:$0xff]
        %v180 = vld [vmem:[%s167 + $0x60] sm:$0xff]
        %v181 = vld [vmem:[%s167 + $0x68] sm:$0xff]
        %v182 = vld [vmem:[%s167 + $0x70] sm:$0xff]
        %v183 = vld [vmem:[%s167 + $0x78] sm:$0xff]
        %v184 = vadd.f32 %v168, %v176
        %v185 = vrot.slane %v184, 4
        %v186 = vadd.f32 %v184, %v185
        %v187 = vrot.slane %v186, 2
        %v188 = vadd.f32 %v186, %v187
        %v189 = vrot.slane %v188, 1
        %v190 = vadd.f32 %v188, %v189
        %v191 = vadd.f32 %v169, %v177
        %v192 = vrot.slane %v191, 4
        %v193 = vadd.f32 %v191, %v192
        %v194 = vrot.slane %v193, 2
        %v195 = vadd.f32 %v193, %v194
        %v196 = vrot.slane %v195, 1
        %v197 = vadd.f32 %v195, %v196
        %v198 = vadd.f32 %v170, %v178
        %v199 = vrot.slane %v198, 4
        %v200 = vadd.f32 %v198, %v199
        %v201 = vrot.slane %v200, 2
        %v202 = vadd.f32 %v200, %v201
        %v203 = vrot.slane %v202, 1
        %v204 = vadd.f32 %v202, %v203
        %v205 = vadd.f32 %v171, %v179
        %v206 = vrot.slane %v205, 4
        %v207 = vadd.f32 %v205, %v206
        %v208 = vrot.slane %v207, 2
        %v209 = vadd.f32 %v207, %v208
        %v210 = vrot.slane %v209, 1
        %v211 = vadd.f32 %v209, %v210
        %v212 = vadd.f32 %v172, %v180
        %v213 = vrot.slane %v212, 4
        %v214 = vadd.f32 %v212, %v213
        %v215 = vrot.slane %v214, 2
        %v216 = vadd.f32 %v214, %v215
        %v217 = vrot.slane %v216, 1
        %v218 = vadd.f32 %v216, %v217
        %v219 = vadd.f32 %v173, %v181
        %v220 = vrot.slane %v219, 4
        %v221 = vadd.f32 %v219, %v220
        %v222 = vrot.slane %v221, 2
        %v223 = vadd.f32 %v221, %v222
        %v224 = vrot.slane %v223, 1
        %v225 = vadd.f32 %v223, %v224
        %v226 = vadd.f32 %v174, %v182
        %v227 = vrot.slane %v226, 4
        %v228 = vadd.f32 %v226, %v227
        %v229 = vrot.slane %v228, 2
        %v230 = vadd.f32 %v228, %v229
        %v231 = vrot.slane %v230, 1
        %v232 = vadd.f32 %v230, %v231
        %v233 = vadd.f32 %v175, %v183
        %v234 = vrot.slane %v233, 4
        %v235 = vadd.f32 %v233, %v234
        %v236 = vrot.slane %v235, 2
        %v237 = vadd.f32 %v235, %v236
        %v238 = vrot.slane %v237, 1
        %v239 = vadd.f32 %v237, %v238
        %v240 = vmul.f32 %v190, 0.0625
        %v241 = vmul.f32 %v197, 0.0625
        %v242 = vmul.f32 %v204, 0.0625
        %v243 = vmul.f32 %v211, 0.0625
        %v244 = vmul.f32 %v218, 0.0625
        %v245 = vmul.f32 %v225, 0.0625
        %v246 = vmul.f32 %v232, 0.0625
        %v247 = vmul.f32 %v239, 0.0625
        %v248 = vld [vmem:[%s1] sm:$0xff]
        %v249 = vld [vmem:[%s1 + $0x8] sm:$0xff]
        %v250 = vld [vmem:[%s1 + $0x10] sm:$0xff]
        %v251 = vld [vmem:[%s1 + $0x18] sm:$0xff]
        %v252 = vld [vmem:[%s1 + $0x20] sm:$0xff]
        %v253 = vld [vmem:[%s1 + $0x28] sm:$0xff]
        %v254 = vld [vmem:[%s1 + $0x30] sm:$0xff]
        %v255 = vld [vmem:[%s1 + $0x38] sm:$0xff]
        %v256 = vld [vmem:[%s1 + $0x40] sm:$0xff]
        %v257 = vld [vmem:[%s1 + $0x48] sm:$0xff]
        %v258 = vld [vmem:[%s1 + $0x50] sm:$0xff]
        %v259 = vld [vmem:[%s1 + $0x58] sm:$0xff]
        %v260 = vld [vmem:[%s1 + $0x60] sm:$0xff]
        %v261 = vld [vmem:[%s1 + $0x68] sm:$0xff]
        %v262 = vld [vmem:[%s1 + $0x70] sm:$0xff]
        %v263 = vld [vmem:[%s1 + $0x78] sm:$0xff]
        %v264 = vld [vmem:[%s1 + $0x80] sm:$0xff]
        %v265 = vld [vmem:[%s1 + $0x88] sm:$0xff]
        %v266 = vld [vmem:[%s1 + $0x90] sm:$0xff]
        %v267 = vld [vmem:[%s1 + $0x98] sm:$0xff]
        %v268 = vld [vmem:[%s1 + $0xa0] sm:$0xff]
        %v269 = vld [vmem:[%s1 + $0xa8] sm:$0xff]
        %v270 = vld [vmem:[%s1 + $0xb0] sm:$0xff]
        %v271 = vld [vmem:[%s1 + $0xb8] sm:$0xff]
        %v272 = vld [vmem:[%s1 + $0xc0] sm:$0xff]
        %v273 = vld [vmem:[%s1 + $0xc8] sm:$0xff]
        %v274 = vld [vmem:[%s1 + $0xd0] sm:$0xff]
        %v275 = vld [vmem:[%s1 + $0xd8] sm:$0xff]
        %v276 = vld [vmem:[%s1 + $0xe0] sm:$0xff]
        %v277 = vld [vmem:[%s1 + $0xe8] sm:$0xff]
        %v278 = vld [vmem:[%s1 + $0xf0] sm:$0xff]
        %v279 = vld [vmem:[%s1 + $0xf8] sm:$0xff]
        %v280 = vld [vmem:[%s1 + $0x100] sm:$0xff]
        %v281 = vld [vmem:[%s1 + $0x108] sm:$0xff]
        %v282 = vld [vmem:[%s1 + $0x110] sm:$0xff]
        %v283 = vld [vmem:[%s1 + $0x118] sm:$0xff]
        %v284 = vld [vmem:[%s1 + $0x120] sm:$0xff]
        %v285 = vld [vmem:[%s1 + $0x128] sm:$0xff]
        %v286 = vld [vmem:[%s1 + $0x130] sm:$0xff]
        %v287 = vld [vmem:[%s1 + $0x138] sm:$0xff]
        %v288 = vld [vmem:[%s1 + $0x140] sm:$0xff]
        %v289 = vld [vmem:[%s1 + $0x148] sm:$0xff]
        %v290 = vld [vmem:[%s1 + $0x150] sm:$0xff]
        %v291 = vld [vmem:[%s1 + $0x158] sm:$0xff]
        %v292 = vld [vmem:[%s1 + $0x160] sm:$0xff]
        %v293 = vld [vmem:[%s1 + $0x168] sm:$0xff]
        %v294 = vld [vmem:[%s1 + $0x170] sm:$0xff]
        %v295 = vld [vmem:[%s1 + $0x178] sm:$0xff]
        %v296 = vld [vmem:[%s1 + $0x180] sm:$0xff]
        %v297 = vld [vmem:[%s1 + $0x188] sm:$0xff]
        %v298 = vld [vmem:[%s1 + $0x190] sm:$0xff]
        %v299 = vld [vmem:[%s1 + $0x198] sm:$0xff]
        %v300 = vld [vmem:[%s1 + $0x1a0] sm:$0xff]
        %v301 = vld [vmem:[%s1 + $0x1a8] sm:$0xff]
        %v302 = vld [vmem:[%s1 + $0x1b0] sm:$0xff]
        %v303 = vld [vmem:[%s1 + $0x1b8] sm:$0xff]
        %v304 = vld [vmem:[%s1 + $0x1c0] sm:$0xff]
        %v305 = vld [vmem:[%s1 + $0x1c8] sm:$0xff]
        %v306 = vld [vmem:[%s1 + $0x1d0] sm:$0xff]
        %v307 = vld [vmem:[%s1 + $0x1d8] sm:$0xff]
        %v308 = vld [vmem:[%s1 + $0x1e0] sm:$0xff]
        %v309 = vld [vmem:[%s1 + $0x1e8] sm:$0xff]
        %v310 = vld [vmem:[%s1 + $0x1f0] sm:$0xff]
        %v311 = vld [vmem:[%s1 + $0x1f8] sm:$0xff]
        %v312 = vld [vmem:[%s1 + $0x200] sm:$0xff]
        %v313 = vld [vmem:[%s1 + $0x208] sm:$0xff]
        %v314 = vld [vmem:[%s1 + $0x210] sm:$0xff]
        %v315 = vld [vmem:[%s1 + $0x218] sm:$0xff]
        %v316 = vld [vmem:[%s1 + $0x220] sm:$0xff]
        %v317 = vld [vmem:[%s1 + $0x228] sm:$0xff]
        %v318 = vld [vmem:[%s1 + $0x230] sm:$0xff]
        %v319 = vld [vmem:[%s1 + $0x238] sm:$0xff]
        %v320 = vld [vmem:[%s1 + $0x240] sm:$0xff]
        %v321 = vld [vmem:[%s1 + $0x248] sm:$0xff]
        %v322 = vld [vmem:[%s1 + $0x250] sm:$0xff]
        %v323 = vld [vmem:[%s1 + $0x258] sm:$0xff]
        %v324 = vld [vmem:[%s1 + $0x260] sm:$0xff]
        %v325 = vld [vmem:[%s1 + $0x268] sm:$0xff]
        %v326 = vld [vmem:[%s1 + $0x270] sm:$0xff]
        %v327 = vld [vmem:[%s1 + $0x278] sm:$0xff]
        %v328 = vld [vmem:[%s1 + $0x280] sm:$0xff]
        %v329 = vld [vmem:[%s1 + $0x288] sm:$0xff]
        %v330 = vld [vmem:[%s1 + $0x290] sm:$0xff]
        %v331 = vld [vmem:[%s1 + $0x298] sm:$0xff]
        %v332 = vld [vmem:[%s1 + $0x2a0] sm:$0xff]
        %v333 = vld [vmem:[%s1 + $0x2a8] sm:$0xff]
        %v334 = vld [vmem:[%s1 + $0x2b0] sm:$0xff]
        %v335 = vld [vmem:[%s1 + $0x2b8] sm:$0xff]
        %v336 = vld [vmem:[%s1 + $0x2c0] sm:$0xff]
        %v337 = vld [vmem:[%s1 + $0x2c8] sm:$0xff]
        %v338 = vld [vmem:[%s1 + $0x2d0] sm:$0xff]
        %v339 = vld [vmem:[%s1 + $0x2d8] sm:$0xff]
        %v340 = vld [vmem:[%s1 + $0x2e0] sm:$0xff]
        %v341 = vld [vmem:[%s1 + $0x2e8] sm:$0xff]
        %v342 = vld [vmem:[%s1 + $0x2f0] sm:$0xff]
        %v343 = vld [vmem:[%s1 + $0x2f8] sm:$0xff]
        %v344 = vld [vmem:[%s1 + $0x300] sm:$0xff]
        %v345 = vld [vmem:[%s1 + $0x308] sm:$0xff]
        %v346 = vld [vmem:[%s1 + $0x310] sm:$0xff]
        %v347 = vld [vmem:[%s1 + $0x318] sm:$0xff]
        %v348 = vld [vmem:[%s1 + $0x320] sm:$0xff]
        %v349 = vld [vmem:[%s1 + $0x328] sm:$0xff]
        %v350 = vld [vmem:[%s1 + $0x330] sm:$0xff]
        %v351 = vld [vmem:[%s1 + $0x338] sm:$0xff]
        %v352 = vld [vmem:[%s1 + $0x340] sm:$0xff]
        %v353 = vld [vmem:[%s1 + $0x348] sm:$0xff]
        %v354 = vld [vmem:[%s1 + $0x350] sm:$0xff]
        %v355 = vld [vmem:[%s1 + $0x358] sm:$0xff]
        %v356 = vld [vmem:[%s1 + $0x360] sm:$0xff]
        %v357 = vld [vmem:[%s1 + $0x368] sm:$0xff]
        %v358 = vld [vmem:[%s1 + $0x370] sm:$0xff]
        %v359 = vld [vmem:[%s1 + $0x378] sm:$0xff]
        %v360 = vld [vmem:[%s1 + $0x380] sm:$0xff]
        %v361 = vld [vmem:[%s1 + $0x388] sm:$0xff]
        %v362 = vld [vmem:[%s1 + $0x390] sm:$0xff]
        %v363 = vld [vmem:[%s1 + $0x398] sm:$0xff]
        %v364 = vld [vmem:[%s1 + $0x3a0] sm:$0xff]
        %v365 = vld [vmem:[%s1 + $0x3a8] sm:$0xff]
        %v366 = vld [vmem:[%s1 + $0x3b0] sm:$0xff]
        %v367 = vld [vmem:[%s1 + $0x3b8] sm:$0xff]
        %v368 = vld [vmem:[%s1 + $0x3c0] sm:$0xff]
        %v369 = vld [vmem:[%s1 + $0x3c8] sm:$0xff]
        %v370 = vld [vmem:[%s1 + $0x3d0] sm:$0xff]
        %v371 = vld [vmem:[%s1 + $0x3d8] sm:$0xff]
        %v372 = vld [vmem:[%s1 + $0x3e0] sm:$0xff]
        %v373 = vld [vmem:[%s1 + $0x3e8] sm:$0xff]
        %v374 = vld [vmem:[%s1 + $0x3f0] sm:$0xff]
        %v375 = vld [vmem:[%s1 + $0x3f8] sm:$0xff]
        %v376 = vld [vmem:[%s2] sm:$0x1]
        %377 = vmatprep.subr.mxu0 0.0
        %378 = vmatpush1.msra.mxu0 %v248
        %379 = vmatprep.subr.mxu0 0.0
        %380 = vmatpush1.msra.mxu0 %v249
        %381 = vmatprep.subr.mxu0 0.0
        %382 = vmatpush1.msra.mxu0 %v250
        %383 = vmatprep.subr.mxu0 0.0
        %384 = vmatpush1.msra.mxu0 %v251
        %385 = vmatprep.subr.mxu0 0.0
        %386 = vmatpush1.msra.mxu0 %v252
        %387 = vmatprep.subr.mxu0 0.0
        %388 = vmatpush1.msra.mxu0 %v253
        %389 = vmatprep.subr.mxu0 0.0
        %390 = vmatpush1.msra.mxu0 %v254
        %391 = vmatprep.subr.mxu0 0.0
        %392 = vmatpush1.msra.mxu0 %v255
        %393 = vmatprep.subr.mxu0 0.0
        %394 = vmatpush1.msra.mxu0 %v256
        %395 = vmatprep.subr.mxu0 0.0
        %396 = vmatpush1.msra.mxu0 %v257
        %397 = vmatprep.subr.mxu0 0.0
        %398 = vmatpush1.msra.mxu0 %v258
        %399 = vmatprep.subr.mxu0 0.0
        %400 = vmatpush1.msra.mxu0 %v259
        %401 = vmatprep.subr.mxu0 0.0
        %402 = vmatpush1.msra.mxu0 %v260
        %403 = vmatprep.subr.mxu0 0.0
        %404 = vmatpush1.msra.mxu0 %v261
        %405 = vmatprep.subr.mxu0 0.0
        %406 = vmatpush1.msra.mxu0 %v262
        %407 = vmatprep.subr.mxu0 0.0
        %408 = vmatpush1.msra.mxu0 %v263
        %409 = vmatprep.subr.mxu0 0.0
        %410 = vmatpush1.msra.mxu0 %v264
        %411 = vmatprep.subr.mxu0 0.0
        %412 = vmatpush1.msra.mxu0 %v265
        %413 = vmatprep.subr.mxu0 0.0
        %414 = vmatpush1.msra.mxu0 %v266
        %415 = vmatprep.subr.mxu0 0.0
        %416 = vmatpush1.msra.mxu0 %v267
        %417 = vmatprep.subr.mxu0 0.0
        %418 = vmatpush1.msra.mxu0 %v268
        %419 = vmatprep.subr.mxu0 0.0
        %420 = vmatpush1.msra.mxu0 %v269
        %421 = vmatprep.subr.mxu0 0.0
        %422 = vmatpush1.msra.mxu0 %v270
        %423 = vmatprep.subr.mxu0 0.0
        %424 = vmatpush1.msra.mxu0 %v271
        %425 = vmatprep.subr.mxu0 0.0
        %426 = vmatpush1.msra.mxu0 %v272
        %427 = vmatprep.subr.mxu0 0.0
        %428 = vmatpush1.msra.mxu0 %v273
        %429 = vmatprep.subr.mxu0 0.0
        %430 = vmatpush1.msra.mxu0 %v274
        %431 = vmatprep.subr.mxu0 0.0
        %432 = vmatpush1.msra.mxu0 %v275
        %433 = vmatprep.subr.mxu0 0.0
        %434 = vmatpush1.msra.mxu0 %v276
        %435 = vmatprep.subr.mxu0 0.0
        %436 = vmatpush1.msra.mxu0 %v277
        %437 = vmatprep.subr.mxu0 0.0
        %438 = vmatpush1.msra.mxu0 %v278
        %439 = vmatprep.subr.mxu0 0.0
        %440 = vmatpush1.msra.mxu0 %v279
        %441 = vmatprep.mubr.f32.mxu0 %v241
        %442 = vmatmul.mubr.f32.gmra.mrb[0].mxu0 %v240
        %v443 = vpop.f32.mrb[0].mxu0
        %v444 = vadd.f32 %v376, %v443
        %v445 = vpop.f32.mrb[0].mxu0
        %446 = vdwg.mxu0
        %447 = vmatprep.subr.mxu0 0.0
        %448 = vmatpush1.msra.mxu0 %v280
        %449 = vmatprep.subr.mxu0 0.0
        %450 = vmatpush1.msra.mxu0 %v281
        %451 = vmatprep.subr.mxu0 0.0
        %452 = vmatpush1.msra.mxu0 %v282
        %453 = vmatprep.subr.mxu0 0.0
        %454 = vmatpush1.msra.mxu0 %v283
        %455 = vmatprep.subr.mxu0 0.0
        %456 = vmatpush1.msra.mxu0 %v284
        %457 = vmatprep.subr.mxu0 0.0
        %458 = vmatpush1.msra.mxu0 %v285
        %459 = vmatprep.subr.mxu0 0.0
        %460 = vmatpush1.msra.mxu0 %v286
        %461 = vmatprep.subr.mxu0 0.0
        %462 = vmatpush1.msra.mxu0 %v287
        %463 = vmatprep.subr.mxu0 0.0
        %464 = vmatpush1.msra.mxu0 %v288
        %465 = vmatprep.subr.mxu0 0.0
        %466 = vmatpush1.msra.mxu0 %v289
        %467 = vmatprep.subr.mxu0 0.0
        %468 = vmatpush1.msra.mxu0 %v290
        %469 = vmatprep.subr.mxu0 0.0
        %470 = vmatpush1.msra.mxu0 %v291
        %471 = vmatprep.subr.mxu0 0.0
        %472 = vmatpush1.msra.mxu0 %v292
        %473 = vmatprep.subr.mxu0 0.0
        %474 = vmatpush1.msra.mxu0 %v293
        %475 = vmatprep.subr.mxu0 0.0
        %476 = vmatpush1.msra.mxu0 %v294
        %477 = vmatprep.subr.mxu0 0.0
        %478 = vmatpush1.msra.mxu0 %v295
        %479 = vmatprep.subr.mxu0 0.0
        %480 = vmatpush1.msra.mxu0 %v296
        %481 = vmatprep.subr.mxu0 0.0
        %482 = vmatpush1.msra.mxu0 %v297
        %483 = vmatprep.subr.mxu0 0.0
        %484 = vmatpush1.msra.mxu0 %v298
        %485 = vmatprep.subr.mxu0 0.0
        %486 = vmatpush1.msra.mxu0 %v299
        %487 = vmatprep.subr.mxu0 0.0
        %488 = vmatpush1.msra.mxu0 %v300
        %489 = vmatprep.subr.mxu0 0.0
        %490 = vmatpush1.msra.mxu0 %v301
        %491 = vmatprep.subr.mxu0 0.0
        %492 = vmatpush1.msra.mxu0 %v302
        %493 = vmatprep.subr.mxu0 0.0
        %494 = vmatpush1.msra.mxu0 %v303
        %495 = vmatprep.subr.mxu0 0.0
        %496 = vmatpush1.msra.mxu0 %v304
        %497 = vmatprep.subr.mxu0 0.0
        %498 = vmatpush1.msra.mxu0 %v305
        %499 = vmatprep.subr.mxu0 0.0
        %500 = vmatpush1.msra.mxu0 %v306
        %501 = vmatprep.subr.mxu0 0.0
        %502 = vmatpush1.msra.mxu0 %v307
        %503 = vmatprep.subr.mxu0 0.0
        %504 = vmatpush1.msra.mxu0 %v308
        %505 = vmatprep.subr.mxu0 0.0
        %506 = vmatpush1.msra.mxu0 %v309
        %507 = vmatprep.subr.mxu0 0.0
        %508 = vmatpush1.msra.mxu0 %v310
        %509 = vmatprep.subr.mxu0 0.0
        %510 = vmatpush1.msra.mxu0 %v311
        %511 = vmatprep.mubr.f32.mxu0 %v243
        %512 = vmatmul.mubr.f32.gmra.mrb[0].mxu0 %v242
        %v513 = vpop.f32.mrb[0].mxu0
        %v514 = vadd.f32 %v444, %v513
        %v515 = vpop.f32.mrb[0].mxu0
        %516 = vdwg.mxu0
        %517 = vmatprep.subr.mxu0 0.0
        %518 = vmatpush1.msra.mxu0 %v312
        %519 = vmatprep.subr.mxu0 0.0
        %520 = vmatpush1.msra.mxu0 %v313
        %521 = vmatprep.subr.mxu0 0.0
        %522 = vmatpush1.msra.mxu0 %v314
        %523 = vmatprep.subr.mxu0 0.0
        %524 = vmatpush1.msra.mxu0 %v315
        %525 = vmatprep.subr.mxu0 0.0
        %526 = vmatpush1.msra.mxu0 %v316
        %527 = vmatprep.subr.mxu0 0.0
        %528 = vmatpush1.msra.mxu0 %v317
        %529 = vmatprep.subr.mxu0 0.0
        %530 = vmatpush1.msra.mxu0 %v318
        %531 = vmatprep.subr.mxu0 0.0
        %532 = vmatpush1.msra.mxu0 %v319
        %533 = vmatprep.subr.mxu0 0.0
        %534 = vmatpush1.msra.mxu0 %v320
        %535 = vmatprep.subr.mxu0 0.0
        %536 = vmatpush1.msra.mxu0 %v321
        %537 = vmatprep.subr.mxu0 0.0
        %538 = vmatpush1.msra.mxu0 %v322
        %539 = vmatprep.subr.mxu0 0.0
        %540 = vmatpush1.msra.mxu0 %v323
        %541 = vmatprep.subr.mxu0 0.0
        %542 = vmatpush1.msra.mxu0 %v324
        %543 = vmatprep.subr.mxu0 0.0
        %544 = vmatpush1.msra.mxu0 %v325
        %545 = vmatprep.subr.mxu0 0.0
        %546 = vmatpush1.msra.mxu0 %v326
        %547 = vmatprep.subr.mxu0 0.0
        %548 = vmatpush1.msra.mxu0 %v327
        %549 = vmatprep.subr.mxu0 0.0
        %550 = vmatpush1.msra.mxu0 %v328
        %551 = vmatprep.subr.mxu0 0.0
        %552 = vmatpush1.msra.mxu0 %v329
        %553 = vmatprep.subr.mxu0 0.0
        %554 = vmatpush1.msra.mxu0 %v330
        %555 = vmatprep.subr.mxu0 0.0
        %556 = vmatpush1.msra.mxu0 %v331
        %557 = vmatprep.subr.mxu0 0.0
        %558 = vmatpush1.msra.mxu0 %v332
        %559 = vmatprep.subr.mxu0 0.0
        %560 = vmatpush1.msra.mxu0 %v333
        %561 = vmatprep.subr.mxu0 0.0
        %562 = vmatpush1.msra.mxu0 %v334
        %563 = vmatprep.subr.mxu0 0.0
        %564 = vmatpush1.msra.mxu0 %v335
        %565 = vmatprep.subr.mxu0 0.0
        %566 = vmatpush1.msra.mxu0 %v336
        %567 = vmatprep.subr.mxu0 0.0
        %568 = vmatpush1.msra.mxu0 %v337
        %569 = vmatprep.subr.mxu0 0.0
        %570 = vmatpush1.msra.mxu0 %v338
        %571 = vmatprep.subr.mxu0 0.0
        %572 = vmatpush1.msra.mxu0 %v339
        %573 = vmatprep.subr.mxu0 0.0
        %574 = vmatpush1.msra.mxu0 %v340
        %575 = vmatprep.subr.mxu0 0.0
        %576 = vmatpush1.msra.mxu0 %v341
        %577 = vmatprep.subr.mxu0 0.0
        %578 = vmatpush1.msra.mxu0 %v342
        %579 = vmatprep.subr.mxu0 0.0
        %580 = vmatpush1.msra.mxu0 %v343
        %581 = vmatprep.mubr.f32.mxu0 %v245
        %582 = vmatmul.mubr.f32.gmra.mrb[0].mxu0 %v244
        %v583 = vpop.f32.mrb[0].mxu0
        %v584 = vadd.f32 %v514, %v583
        %v585 = vpop.f32.mrb[0].mxu0
        %586 = vdwg.mxu0
        %587 = vmatprep.subr.mxu0 0.0
        %588 = vmatpush1.msra.mxu0 %v344
        %589 = vmatprep.subr.mxu0 0.0
        %590 = vmatpush1.msra.mxu0 %v345
        %591 = vmatprep.subr.mxu0 0.0
        %592 = vmatpush1.msra.mxu0 %v346
        %593 = vmatprep.subr.mxu0 0.0
        %594 = vmatpush1.msra.mxu0 %v347
        %595 = vmatprep.subr.mxu0 0.0
        %596 = vmatpush1.msra.mxu0 %v348
        %597 = vmatprep.subr.mxu0 0.0
        %598 = vmatpush1.msra.mxu0 %v349
        %599 = vmatprep.subr.mxu0 0.0
        %600 = vmatpush1.msra.mxu0 %v350
        %601 = vmatprep.subr.mxu0 0.0
        %602 = vmatpush1.msra.mxu0 %v351
        %603 = vmatprep.subr.mxu0 0.0
        %604 = vmatpush1.msra.mxu0 %v352
        %605 = vmatprep.subr.mxu0 0.0
        %606 = vmatpush1.msra.mxu0 %v353
        %607 = vmatprep.subr.mxu0 0.0
        %608 = vmatpush1.msra.mxu0 %v354
        %609 = vmatprep.subr.mxu0 0.0
        %610 = vmatpush1.msra.mxu0 %v355
        %611 = vmatprep.subr.mxu0 0.0
        %612 = vmatpush1.msra.mxu0 %v356
        %613 = vmatprep.subr.mxu0 0.0
        %614 = vmatpush1.msra.mxu0 %v357
        %615 = vmatprep.subr.mxu0 0.0
        %616 = vmatpush1.msra.mxu0 %v358
        %617 = vmatprep.subr.mxu0 0.0
        %618 = vmatpush1.msra.mxu0 %v359
        %619 = vmatprep.subr.mxu0 0.0
        %620 = vmatpush1.msra.mxu0 %v360
        %621 = vmatprep.subr.mxu0 0.0
        %622 = vmatpush1.msra.mxu0 %v361
        %623 = vmatprep.subr.mxu0 0.0
        %624 = vmatpush1.msra.mxu0 %v362
        %625 = vmatprep.subr.mxu0 0.0
        %626 = vmatpush1.msra.mxu0 %v363
        %627 = vmatprep.subr.mxu0 0.0
        %628 = vmatpush1.msra.mxu0 %v364
        %629 = vmatprep.subr.mxu0 0.0
        %630 = vmatpush1.msra.mxu0 %v365
        %631 = vmatprep.subr.mxu0 0.0
        %632 = vmatpush1.msra.mxu0 %v366
        %633 = vmatprep.subr.mxu0 0.0
        %634 = vmatpush1.msra.mxu0 %v367
        %635 = vmatprep.subr.mxu0 0.0
        %636 = vmatpush1.msra.mxu0 %v368
        %637 = vmatprep.subr.mxu0 0.0
        %638 = vmatpush1.msra.mxu0 %v369
        %639 = vmatprep.subr.mxu0 0.0
        %640 = vmatpush1.msra.mxu0 %v370
        %641 = vmatprep.subr.mxu0 0.0
        %642 = vmatpush1.msra.mxu0 %v371
        %643 = vmatprep.subr.mxu0 0.0
        %644 = vmatpush1.msra.mxu0 %v372
        %645 = vmatprep.subr.mxu0 0.0
        %646 = vmatpush1.msra.mxu0 %v373
        %647 = vmatprep.subr.mxu0 0.0
        %648 = vmatpush1.msra.mxu0 %v374
        %649 = vmatprep.subr.mxu0 0.0
        %650 = vmatpush1.msra.mxu0 %v375
        %651 = vmatprep.mubr.f32.mxu0 %v247
        %652 = vmatmul.mubr.f32.gmra.mrb[0].mxu0 %v246
        %v653 = vpop.f32.mrb[0].mxu0
        %v654 = vadd.f32 %v584, %v653
        %v655 = vpop.f32.mrb[0].mxu0
        %656 = vdwg.mxu0
        %vm657 = vcmask 253952
        %658 = vst.msk [vmem:[%s162] sm:$0x1] %vm657, %v654
        %s659 = sand.u32 %s93, 1
        %s660 = scalar_lea.sflag [#allocation3], %s659
        %s661 = sand.u32 %s93, 1
        %s662 = scalar_lea.vmem [#allocation2], %s661
        // Predicated region
        $region33: #{encoder_cnn_head.1} parent=31 // pred_check
          %p663 = pneg %p103
        $region34: #{encoder_cnn_head.1} parent=31 // pred_check_branch
          %665 = sbr.rel (%p663) target = $region36
        $region35: #{encoder_cnn_head.1} parent=31 // pred_region
          %s667 = ssub.s32 16, 16
          %668 = vsyncadd %s660, %s667
          %s669 = smul.addr %s17, 16
          %s670 = scalar_lea.hbm %s3, %s669
          %s672 = sshll.u32 %s662, 4
          %s673 = int_to_ptr.vmem [resolvable:$true] %s672
          %675 = dma.vmem_to_hbm [thread:$0]  %s673, 16, %s670, %s660
        $region36: #{encoder_cnn_head.1} parent=31 // pred_fallthru
          _
      $region32: #{encoder_cnn_head.1} parent=5 // pred_fallthru
        _
      %p676 = scmp.le.s32.totalorder 2, %s12
      // Predicated region
      $region37: #{encoder_cnn_head.1} parent=5 // pred_check
        %p677 = pneg %p676
      $region38: #{encoder_cnn_head.1} parent=5 // pred_check_branch
        %679 = sbr.rel (%p677) target = $region40
      $region39: #{encoder_cnn_head.1} parent=5 // pred_region
        %s680 = ssub.s32 %s12, 2
        // Predicated region
        $region41: #{encoder_cnn_head.1} parent=39 // pred_check
          %p681 = pneg %p109
        $region42: #{encoder_cnn_head.1} parent=39 // pred_check_branch
          %683 = sbr.rel (%p681) target = $region44
        $region43: #{encoder_cnn_head.1} parent=39 // pred_region
          %s684 = sand.u32 %s94, 1
          %s685 = scalar_lea.sflag [#allocation3], %s684
          %s686 = sand.u32 %s94, 1
          %s687 = scalar_lea.vmem [#allocation2], %s686
          %688 = dma.done %s685, 16
        $region44: #{encoder_cnn_head.1} parent=39 // pred_fallthru
          _
      $region40: #{encoder_cnn_head.1} parent=5 // pred_fallthru
        _
    $region6: #{encoder_cnn_head.1} parent=1 // loop_footer
      %s16 = sadd.s32 1, %s12
    $region7: #{encoder_cnn_head.1} parent=1 // loop_footer_branch
      %11 = sbr.rel target = $region3
    $region8: #{encoder_cnn_head.1} parent=1 // loop_exit
      _
    %689 = vsyncpa [#allocation3], 1
    %s690 = scalar_lea.sflag [#allocation3], 1
    %691 = vsyncpa %s690, 1

</llo_original>
